<compile_context>
chip_gen: v6e
topology: v6e:2x2x1
jax: 0.10.0
libtpu: 0.0.40
codegen_flags: <defaults>
</compile_context>

<pallas_src>
import jax
import jax.numpy as jnp
from jax.experimental import pallas as pl
from jax.experimental.pallas import tpu as pltpu

_CompilerParams = getattr(pltpu, "CompilerParams",
                          getattr(pltpu, "TPUCompilerParams", None))


def _glu_kernel(out_ref, gate_ref, o_ref):
    # out_ref, gate_ref, o_ref all arrive as dense (tr, tl) tiles.
    g = gate_ref[...].astype(jnp.float32)
    sig = pl.reciprocal(1.0 + jnp.exp(-g))          # exact sigmoid; exp -> EUP
    o_ref[...] = (out_ref[...] * sig).astype(o_ref.dtype)


def _round_down(x, m):
    return max(m, (x // m) * m)


def _round_up(x, m):
    return ((x + m - 1) // m) * m


def _sublane(dtype):
    """Sublane packing: 8 for 32-bit, 16 for 16-bit, 32 for 8-bit dtypes."""
    bits = jnp.dtype(dtype).itemsize * 8
    return max(8, 256 // bits)


def _vmem_capacity_bytes():
    try:
        cap = int(pltpu.get_tpu_info().vmem_capacity_bytes)
        if cap > 0:
            return cap
    except Exception:
        pass
    return 64 * 1024 * 1024  # conservative: v7x per-TensorCore VMEM


def _largest_lane_divisor(inner, cap):
    """Largest multiple-of-128 divisor of `inner` (inner % 128 == 0) <= cap."""
    nb = inner // 128
    cap_blocks = max(1, cap // 128)
    best, d = 1, 1
    while d * d <= nb:
        if nb % d == 0:
            for q in (d, nb // d):
                if q <= cap_blocks and q > best:
                    best = q
        d += 1
    return best * 128


def glu_pallas(x, dim):
    """GLU along axis `dim`: chunk(2, dim) -> out * sigmoid(gate)."""
    ndim = x.ndim
    dim = dim % ndim
    full = x.shape[dim]
    assert full % 2 == 0, "GLU split dimension must be even"
    half = full // 2

    lead = 1
    for s in x.shape[:dim]:
        lead *= s
    trail = 1
    for s in x.shape[dim + 1:]:
        trail *= s
    inner = half * trail  # contiguous elements per (row, half)

    itemsize = jnp.dtype(x.dtype).itemsize
    sub = _sublane(x.dtype)

    # Generation-aware budgets: working set ~= 6 x block bytes.
    vmem_cap = _vmem_capacity_bytes()
    block_budget = min(8 * 1024 * 1024,
                       max(sub * 128 * itemsize, (vmem_cap * 55 // 100) // 6))
    budget_elems = max(sub * 128, block_budget // itemsize)
    vmem_limit = min(vmem_cap * 3 // 4, vmem_cap - 16 * 1024 * 1024)
    vmem_limit = max(int(vmem_limit), 32 * 1024 * 1024)

    cost = pl.CostEstimate(
        flops=int(x.size),
        transcendentals=int(x.size) // 2,
        bytes_accessed=int(x.size) * itemsize * 3 // 2,
    )

    out_shape_full = x.shape[:dim] + (half,) + x.shape[dim + 1:]

    if inner % 128 == 0:
        # ---- Fast path: dense 2-D blocks, halves = column-block offsets ----
        x2 = x.reshape(lead, 2 * inner)

        lane_cap = max(128, min(inner, 4096,
                                _round_down(budget_elems // sub, 128)))
        lane_tile = _largest_lane_divisor(inner, lane_cap)
        max_rows = max(sub, budget_elems // lane_tile)
        row_tile = lead if lead <= max_rows else _round_down(max_rows, sub)

        # Ensure >= 2 blocks on a parallel axis so both v7x TensorCores work.
        if pl.cdiv(lead, row_tile) * (inner // lane_tile) == 1:
            if lead > sub:
                row_tile = _round_up(pl.cdiv(lead, 2), sub)
            elif inner // 128 >= 2:
                lane_tile = _largest_lane_divisor(inner, inner // 2)

        n_lane_blocks = inner // lane_tile
        grid = (pl.cdiv(lead, row_tile), n_lane_blocks)

        out2d = pl.pallas_call(
            _glu_kernel,
            out_shape=jax.ShapeDtypeStruct((lead, inner), x.dtype),
            grid=grid,
            in_specs=[
                # "out" half: columns [0, inner)
                pl.BlockSpec((row_tile, lane_tile), lambda i, j: (i, j)),
                # "gate" half: columns [inner, 2*inner) -> block offset
                pl.BlockSpec((row_tile, lane_tile),
                             lambda i, j: (i, j + n_lane_blocks)),
            ],
            out_specs=pl.BlockSpec((row_tile, lane_tile), lambda i, j: (i, j)),
            compiler_params=_CompilerParams(
                dimension_semantics=("parallel", "parallel"),
                vmem_limit_bytes=vmem_limit,
            ),
            cost_estimate=cost,
        )(x2, x2)
    else:
        # ---- Fallback (unaligned toy shapes): leading size-2 split axis ----
        x4 = x.reshape(lead, 2, 1, inner)

        max_rows = max(sub, budget_elems // max(inner, 1))
        row_tile = lead if lead <= max_rows else _round_down(max_rows, sub)
        if pl.cdiv(lead, row_tile) == 1 and lead > sub:
            row_tile = _round_up(pl.cdiv(lead, 2), sub)

        grid = (pl.cdiv(lead, row_tile),)
        # Singleton dims squeezed -> kernel refs are (row_tile, inner).
        half_block = (row_tile, None, None, inner)

        out2d = pl.pallas_call(
            _glu_kernel,
            out_shape=jax.ShapeDtypeStruct((lead, inner), x.dtype),
            grid=grid,
            in_specs=[
                pl.BlockSpec(half_block, lambda i: (i, 0, 0, 0)),  # out half
                pl.BlockSpec(half_block, lambda i: (i, 1, 0, 0)),  # gate half
            ],
            out_specs=pl.BlockSpec((row_tile, inner), lambda i: (i, 0)),
            compiler_params=_CompilerParams(
                dimension_semantics=("parallel",),
                vmem_limit_bytes=vmem_limit,
            ),
            cost_estimate=cost,
        )(x4, x4)

    return out2d.reshape(out_shape_full)


def _glu_ref(x, dim):
    out, gate = jnp.split(x, 2, axis=dim)
    return out * jax.nn.sigmoid(gate)


if __name__ == "__main__":
    key = jax.random.PRNGKey(0)
    cases = [
        # (shape, dim, dtype)
        ((2, 8, 64), -1, jnp.float32),     # FCPE-style (B, S, H); fallback path (inner=32)
        ((2, 4, 16, 16), 1, jnp.float32),  # NCHW channel split; fast path (inner=512)
        ((4, 16, 256), -1, jnp.float32),   # fast path, multiple row blocks
        ((2, 8, 512), -1, jnp.float32),    # fast path, inner=256
        ((2, 8, 256), -1, jnp.bfloat16),   # low-precision path
    ]
    for idx, (shape, dim, dtype) in enumerate(cases):
        key, sub_key = jax.random.split(key)
        x = jax.random.normal(sub_key, shape, dtype=jnp.float32).astype(dtype)
        y = glu_pallas(x, dim)
        jax.block_until_ready(y)
        y_ref = _glu_ref(x, dim)
        assert y.shape == y_ref.shape, (idx, y.shape, y_ref.shape)
        tol = 2e-2 if dtype == jnp.bfloat16 else 1e-5
        assert jnp.allclose(
            y.astype(jnp.float32), y_ref.astype(jnp.float32), atol=tol, rtol=tol
        ), f"case {idx} mismatch"
    print("KERNEL_OK")
</pallas_src>

<mosaic_0001>
module attributes {stable_mosaic.version = 11 : i64} {
  func.func @_glu_kernel(%arg0: i32, %arg1: memref<8x1x1x32xf32, #tpu.memory_space<vmem>>, %arg2: memref<8x1x1x32xf32, #tpu.memory_space<vmem>>, %arg3: memref<8x32xf32, #tpu.memory_space<vmem>>) attributes {dimension_semantics = [#tpu.dimension_semantics<parallel>], iteration_bounds = array<i64: 2>, scalar_prefetch = 0 : i64, scratch_operands = 0 : i64, tpu.core_type = #tpu.core_type<tc>, window_params = [{transform_indices = @transform_0, window_bounds = array<i64: 8, 1, 1, 32>}, {transform_indices = @transform_1, window_bounds = array<i64: 8, 1, 1, 32>}, {transform_indices = @transform_2, window_bounds = array<i64: 8, 32>}]} {
    %c0 = arith.constant 0 : index
    %c0_0 = arith.constant 0 : index
    %c0_1 = arith.constant 0 : index
    %c0_2 = arith.constant 0 : index
    %0 = vector.load %arg2[%c0, %c0_0, %c0_1, %c0_2] : memref<8x1x1x32xf32, #tpu.memory_space<vmem>>, vector<8x1x1x32xf32>
    %1 = vector.shape_cast %0 : vector<8x1x1x32xf32> to vector<8x32xf32>
    %cst = arith.constant 0.000000e+00 : f32
    %2 = vector.broadcast %cst : f32 to vector<8x32xf32>
    %3 = arith.subf %2, %1 : vector<8x32xf32>
    %4 = math.exp %3 : vector<8x32xf32>
    %cst_3 = arith.constant 1.000000e+00 : f32
    %5 = vector.broadcast %cst_3 : f32 to vector<8x32xf32>
    %6 = arith.addf %5, %4 : vector<8x32xf32>
    %7 = tpu.reciprocal %6 : vector<8x32xf32> -> vector<8x32xf32>
    %c0_4 = arith.constant 0 : index
    %c0_5 = arith.constant 0 : index
    %c0_6 = arith.constant 0 : index
    %c0_7 = arith.constant 0 : index
    %8 = vector.load %arg1[%c0_4, %c0_5, %c0_6, %c0_7] : memref<8x1x1x32xf32, #tpu.memory_space<vmem>>, vector<8x1x1x32xf32>
    %9 = vector.shape_cast %8 : vector<8x1x1x32xf32> to vector<8x32xf32>
    %10 = arith.mulf %9, %7 : vector<8x32xf32>
    %c0_8 = arith.constant 0 : index
    %c0_9 = arith.constant 0 : index
    %11 = vector.load %arg3[%c0_8, %c0_9] : memref<8x32xf32, #tpu.memory_space<vmem>>, vector<8x32xf32>
    tpu.vector_store %arg3[%c0_8, %c0_9], %10 {strides = array<i32>} : memref<8x32xf32, #tpu.memory_space<vmem>>, vector<8x32xf32>,
    return
  }
  func.func @transform_0(%arg0: i32) -> (i32, i32, i32, i32) {
    %c0_i32 = arith.constant 0 : i32
    %c0_i32_0 = arith.constant 0 : i32
    %c0_i32_1 = arith.constant 0 : i32
    %c0_i32_2 = arith.constant 0 : i32
    return %arg0, %c0_i32, %c0_i32_0, %c0_i32_1 : i32, i32, i32, i32
  }
  func.func @transform_1(%arg0: i32) -> (i32, i32, i32, i32) {
    %c1_i32 = arith.constant 1 : i32
    %c0_i32 = arith.constant 0 : i32
    %c0_i32_0 = arith.constant 0 : i32
    %c0_i32_1 = arith.constant 0 : i32
    return %arg0, %c1_i32, %c0_i32, %c0_i32_0 : i32, i32, i32, i32
  }
  func.func @transform_2(%arg0: i32) -> (i32, i32) {
    %c0_i32 = arith.constant 0 : i32
    %c0_i32_0 = arith.constant 0 : i32
    return %arg0, %c0_i32 : i32, i32
  }
}

</mosaic_0001>

<llo_original>
// kernel: tpu_custom_call.1
$region0: #{tpu_custom_call.1}
  #allocation0 [shape = 'u32[]', space=smem, size = 0x4, offset = 0x4, fixed_abs, tag = 'smem constant byte address 0x4 - core index']
  #allocation1 [shape = 'u32[144,128]{1,0:T(1,128)}', space=vmem, size = 0x12000, scoped, tag = 'internal scratch']
  %s0 = inlined_call_operand.hbm [shape: f32[16,2,1,32], index: 0, kind: input, shape index: {}]
  %s1 = inlined_call_operand.hbm [shape: f32[16,2,1,32], index: 1, kind: input, shape index: {}]
  %s2 = inlined_call_operand.hbm [shape: f32[16,32], index: 2, kind: output, shape index: {}]
  %s3 = sld [smem:[#allocation0]]
  $region49: #{tpu_custom_call.1} parent=0
    _
  %s5 = ssub.s32 1, %s3
  %s6 = scalar_select 0, %s5, %s3
  $region1: #{tpu_custom_call.1} parent=0
    #allocation2 [shape = 'u8[8192]{0}', space=vmem, size = 0x2000, scoped, tag = 'input window, operand 0']
    #allocation3 [shape = 's32[2]{0}', space=sflag, size = 0x8, scoped, tag = 'scoped memory for tpu_custom_call.1']
    #allocation4 [shape = 's32[2]{0}', space=sflag, size = 0x8, scoped, tag = 'scoped memory for tpu_custom_call.1']
    #allocation5 [shape = 'u8[8192]{0}', space=vmem, size = 0x2000, scoped, tag = 'input window, operand 1']
    #allocation6 [shape = 's32[2]{0}', space=sflag, size = 0x8, scoped, tag = 'scoped memory for tpu_custom_call.1']
    #allocation7 [shape = 'u8[8192]{0}', space=vmem, size = 0x2000, scoped, tag = 'output window, operand 0']
    %7 = vsyncpa [#allocation3], 0
    %s8 = scalar_lea.sflag [#allocation3], 1
    %9 = vsyncpa %s8, 0
    %10 = vsyncpa [#allocation6], 0
    %s11 = scalar_lea.sflag [#allocation6], 1
    %12 = vsyncpa %s11, 0
    %13 = vsyncpa [#allocation4], 0
    %s14 = scalar_lea.sflag [#allocation4], 1
    %15 = vsyncpa %s14, 0
    loop: start=0, step=1, limit=4
    $region2: #{tpu_custom_call.1} parent=1 // loop_pre_header
      _
    $region3: #{tpu_custom_call.1} parent=1 // loop_header
      %s17 = sphi 0, %s21
      %p18 = scmp.ge.s32.totalorder %s17, 4
      %s27 = sphi 0, %s29
      %s30 = sphi 0, %s27
      %s31 = sphi 0, %s30
      %s47 = sphi 0, %s31
      %s53 = sphi 0, %s55
      %s56 = sphi 0, %s53
      %s57 = sphi 0, %s56
      %s73 = sphi 0, %s57
      %s79 = sphi 0, %s81
      %s82 = sphi 0, %s79
      %s83 = sphi 0, %s82
      %s99 = sphi 0, %s83
    $region4: #{tpu_custom_call.1} parent=1 // loop_header_branch
      %20 = sbr.rel (%p18) target = $region8
    $region5: #{tpu_custom_call.1} parent=1 // loop_body
      %s22 = ssub.s32 %s17, 1
      %s23 = ssub.s32 %s17, 2
      %s24 = sadd.s32 %s17, 1
      %s25 = ssub.s32 %s17, %s24
      %p26 = scmp.eq.s32.totalorder %s25, 0
      %s28 = sadd.s32 %s27, 1
      %s29 = scalar_select %p26, %s27, %s28
      %p32 = pneg %p26
      %p33 = scmp.eq.s32.totalorder %s17, 1
      %p34 = por %p32, %p33
      %p35 = scmp.ne.s32.totalorder %s27, %s30
      %p36 = scmp.eq.s32.totalorder %s17, 0
      %p37 = por %p35, %p36
      %p38 = scmp.ne.s32.totalorder %s27, %s30
      %p39 = scmp.eq.s32.totalorder %s22, 1
      %p40 = por %p38, %p39
      %p41 = scmp.ne.s32.totalorder %s30, %s31
      %p42 = scmp.eq.s32.totalorder %s22, 0
      %p43 = por %p41, %p42
      %p44 = scmp.ne.s32.totalorder %s30, %s31
      %p45 = scmp.eq.s32.totalorder %s23, 1
      %p46 = por %p44, %p45
      %p48 = scmp.ne.s32.totalorder %s31, %s47
      %p49 = scmp.eq.s32.totalorder %s23, 0
      %p50 = por %p48, %p49
      %s51 = ssub.s32 %s17, %s24
      %p52 = scmp.eq.s32.totalorder %s51, 0
      %s54 = sadd.s32 %s53, 1
      %s55 = scalar_select %p52, %s53, %s54
      %p58 = pneg %p52
      %p59 = scmp.eq.s32.totalorder %s17, 1
      %p60 = por %p58, %p59
      %p61 = scmp.ne.s32.totalorder %s53, %s56
      %p62 = scmp.eq.s32.totalorder %s17, 0
      %p63 = por %p61, %p62
      %p64 = scmp.ne.s32.totalorder %s53, %s56
      %p65 = scmp.eq.s32.totalorder %s22, 1
      %p66 = por %p64, %p65
      %p67 = scmp.ne.s32.totalorder %s56, %s57
      %p68 = scmp.eq.s32.totalorder %s22, 0
      %p69 = por %p67, %p68
      %p70 = scmp.ne.s32.totalorder %s56, %s57
      %p71 = scmp.eq.s32.totalorder %s23, 1
      %p72 = por %p70, %p71
      %p74 = scmp.ne.s32.totalorder %s57, %s73
      %p75 = scmp.eq.s32.totalorder %s23, 0
      %p76 = por %p74, %p75
      %s77 = ssub.s32 %s17, %s24
      %p78 = scmp.eq.s32.totalorder %s77, 0
      %s80 = sadd.s32 %s79, 1
      %s81 = scalar_select %p78, %s79, %s80
      %p84 = pneg %p78
      %p85 = scmp.eq.s32.totalorder %s17, 1
      %p86 = por %p84, %p85
      %p87 = scmp.ne.s32.totalorder %s79, %s82
      %p88 = scmp.eq.s32.totalorder %s17, 0
      %p89 = por %p87, %p88
      %p90 = scmp.ne.s32.totalorder %s79, %s82
      %p91 = scmp.eq.s32.totalorder %s22, 1
      %p92 = por %p90, %p91
      %p93 = scmp.ne.s32.totalorder %s82, %s83
      %p94 = scmp.eq.s32.totalorder %s22, 0
      %p95 = por %p93, %p94
      %p96 = scmp.ne.s32.totalorder %s82, %s83
      %p97 = scmp.eq.s32.totalorder %s23, 1
      %p98 = por %p96, %p97
      %p100 = scmp.ne.s32.totalorder %s83, %s99
      %p101 = scmp.eq.s32.totalorder %s23, 0
      %p102 = por %p100, %p101
      %p103 = scmp.le.s32.totalorder 1, %s17
      %p104 = scmp.lt.s32.totalorder %s17, 3
      %p105 = pnand %p103, %p104
      %p106 = pneg %p105
      // Predicated region
      $region9: #{tpu_custom_call.1} parent=5 // pred_check
        _
      $region10: #{tpu_custom_call.1} parent=5 // pred_check_branch
        %108 = sbr.rel (%p105) target = $region12
      $region11: #{tpu_custom_call.1} parent=5 // pred_region
        %s109 = ssub.s32 %s17, 1
      $region12: #{tpu_custom_call.1} parent=5 // pred_fallthru
        _
      %p110 = scmp.lt.s32.totalorder %s17, 2
      // Predicated region
      $region13: #{tpu_custom_call.1} parent=5 // pred_check
        %p111 = pneg %p110
      $region14: #{tpu_custom_call.1} parent=5 // pred_check_branch
        %113 = sbr.rel (%p111) target = $region16
      $region15: #{tpu_custom_call.1} parent=5 // pred_region
        // Predicated region
        $region17: #{tpu_custom_call.1} parent=15 // pred_check
          %p114 = pneg %p37
        $region18: #{tpu_custom_call.1} parent=15 // pred_check_branch
          %116 = sbr.rel (%p114) target = $region20
        $region19: #{tpu_custom_call.1} parent=15 // pred_region
          %s117 = sand.u32 %s27, 1
          %s118 = scalar_lea.sflag [#allocation3], %s117
          %s119 = sand.u32 %s27, 1
          %s120 = smul.addr %s119, 8
          %s121 = scalar_lea.vmem [#allocation2], %s120
          %s122 = smul.u32 8, %s17
          %s124 = ssub.s32 128, 128
          %125 = vsyncadd %s118, %s124
          %s126 = smul.addr %s122, 2
          %s127 = smul.addr %s126, 16
          %s128 = scalar_lea.hbm %s0, %s127
          %s129 = sshll.u32 %s121, 4
          %s130 = int_to_ptr.vmem [resolvable:$true] %s129
          %135 = dma.hbm_to_vmem [thread:$0]  %s128, 128, %s130, %s118, 32, 16, 1
        $region20: #{tpu_custom_call.1} parent=15 // pred_fallthru
          _
        // Predicated region
        $region21: #{tpu_custom_call.1} parent=15 // pred_check
          %p136 = pneg %p63
        $region22: #{tpu_custom_call.1} parent=15 // pred_check_branch
          %138 = sbr.rel (%p136) target = $region24
        $region23: #{tpu_custom_call.1} parent=15 // pred_region
          %s139 = sand.u32 %s53, 1
          %s140 = scalar_lea.sflag [#allocation6], %s139
          %s141 = sand.u32 %s53, 1
          %s142 = smul.addr %s141, 8
          %s143 = scalar_lea.vmem [#allocation5], %s142
          %s144 = smul.u32 8, %s17
          %s146 = ssub.s32 128, 128
          %147 = vsyncadd %s140, %s146
          %s148 = smul.addr %s144, 2
          %s149 = sadd.s32 1, %s148
          %s150 = smul.addr %s149, 16
          %s151 = scalar_lea.hbm %s1, %s150
          %s152 = sshll.u32 %s143, 4
          %s153 = int_to_ptr.vmem [resolvable:$true] %s152
          %158 = dma.hbm_to_vmem [thread:$0]  %s151, 128, %s153, %s140, 32, 16, 1
        $region24: #{tpu_custom_call.1} parent=15 // pred_fallthru
          _
      $region16: #{tpu_custom_call.1} parent=5 // pred_fallthru
        _
      %p159 = scmp.le.s32.totalorder 1, %s17
      %p160 = scmp.lt.s32.totalorder %s17, 3
      %p161 = pnand %p159, %p160
      %p162 = pneg %p161
      // Predicated region
      $region25: #{tpu_custom_call.1} parent=5 // pred_check
        _
      $region26: #{tpu_custom_call.1} parent=5 // pred_check_branch
        %164 = sbr.rel (%p161) target = $region28
      $region27: #{tpu_custom_call.1} parent=5 // pred_region
        %s165 = ssub.s32 %s17, 1
        %s166 = sand.u32 %s30, 1
        %s167 = scalar_lea.sflag [#allocation3], %s166
        %s168 = sand.u32 %s30, 1
        %s169 = smul.addr %s168, 8
        %s170 = scalar_lea.vmem [#allocation2], %s169
        // Predicated region
        $region29: #{tpu_custom_call.1} parent=27 // pred_check
          %p171 = pneg %p43
        $region30: #{tpu_custom_call.1} parent=27 // pred_check_branch
          %173 = sbr.rel (%p171) target = $region32
        $region31: #{tpu_custom_call.1} parent=27 // pred_region
          %174 = dma.done %s167, 128
        $region32: #{tpu_custom_call.1} parent=27 // pred_fallthru
          _
        %s175 = sand.u32 %s56, 1
        %s176 = scalar_lea.sflag [#allocation6], %s175
        %s177 = sand.u32 %s56, 1
        %s178 = smul.addr %s177, 8
        %s179 = scalar_lea.vmem [#allocation5], %s178
        // Predicated region
        $region33: #{tpu_custom_call.1} parent=27 // pred_check
          %p180 = pneg %p69
        $region34: #{tpu_custom_call.1} parent=27 // pred_check_branch
          %182 = sbr.rel (%p180) target = $region36
        $region35: #{tpu_custom_call.1} parent=27 // pred_region
          %183 = dma.done %s176, 128
        $region36: #{tpu_custom_call.1} parent=27 // pred_fallthru
          _
        %s184 = sand.u32 %s30, 1
        %s185 = scalar_lea.sflag [#allocation3], %s184
        %s186 = sand.u32 %s30, 1
        %s187 = smul.addr %s186, 8
        %s188 = scalar_lea.vmem [#allocation2], %s187
        %p189 = pneg %p43
        %p190 = pneg %p40
        %s191 = sand.u32 %s56, 1
        %s192 = scalar_lea.sflag [#allocation6], %s191
        %s193 = sand.u32 %s56, 1
        %s194 = smul.addr %s193, 8
        %s195 = scalar_lea.vmem [#allocation5], %s194
        %p196 = pneg %p69
        %p197 = pneg %p66
        %p198 = pneg %p95
        %p199 = pneg %p92
        %s200 = sand.u32 %s82, 1
        %s201 = scalar_lea.sflag [#allocation4], %s200
        %s202 = sand.u32 %s82, 1
        %s203 = smul.addr %s202, 8
        %s204 = scalar_lea.vmem [#allocation7], %s203
        %s205 = smul.u32 8, %s22
        %s206 = smul.u32 8, %s22
        %v207 = vld [vmem:[%s179] sm:$0x1]
        %v208 = vld [vmem:[%s179 + $0x1] sm:$0x1]
        %v209 = vld [vmem:[%s179 + $0x2] sm:$0x1]
        %v210 = vld [vmem:[%s179 + $0x3] sm:$0x1]
        %v211 = vld [vmem:[%s179 + $0x4] sm:$0x1]
        %v212 = vld [vmem:[%s179 + $0x5] sm:$0x1]
        %v213 = vld [vmem:[%s179 + $0x6] sm:$0x1]
        %v214 = vld [vmem:[%s179 + $0x7] sm:$0x1]
        %v215 = vsub.f32 0.0, %v207
        %v216 = vsub.f32 0.0, %v208
        %v217 = vsub.f32 0.0, %v209
        %v218 = vsub.f32 0.0, %v210
        %v219 = vsub.f32 0.0, %v211
        %v220 = vsub.f32 0.0, %v212
        %v221 = vsub.f32 0.0, %v213
        %v222 = vsub.f32 0.0, %v214
        %v223 = vmul.f32 %v215, 1.442695
        %v224 = vpow.pop %v223
        %v225 = vmul.f32 %v216, 1.442695
        %v226 = vpow.pop %v225
        %v227 = vmul.f32 %v217, 1.442695
        %v228 = vpow.pop %v227
        %v229 = vmul.f32 %v218, 1.442695
        %v230 = vpow.pop %v229
        %v231 = vmul.f32 %v219, 1.442695
        %v232 = vpow.pop %v231
        %v233 = vmul.f32 %v220, 1.442695
        %v234 = vpow.pop %v233
        %v235 = vmul.f32 %v221, 1.442695
        %v236 = vpow.pop %v235
        %v237 = vmul.f32 %v222, 1.442695
        %v238 = vpow.pop %v237
        %v239 = vadd.f32 %v224, 1.0
        %v240 = vadd.f32 %v226, 1.0
        %v241 = vadd.f32 %v228, 1.0
        %v242 = vadd.f32 %v230, 1.0
        %v243 = vadd.f32 %v232, 1.0
        %v244 = vadd.f32 %v234, 1.0
        %v245 = vadd.f32 %v236, 1.0
        %v246 = vadd.f32 %v238, 1.0
        %v247 = vrcp.pop %v239
        %v248 = vrcp.pop %v240
        %v249 = vrcp.pop %v241
        %v250 = vrcp.pop %v242
        %v251 = vrcp.pop %v243
        %v252 = vrcp.pop %v244
        %v253 = vrcp.pop %v245
        %v254 = vrcp.pop %v246
        %v255 = vld [vmem:[%s170] sm:$0x1]
        %v256 = vld [vmem:[%s170 + $0x1] sm:$0x1]
        %v257 = vld [vmem:[%s170 + $0x2] sm:$0x1]
        %v258 = vld [vmem:[%s170 + $0x3] sm:$0x1]
        %v259 = vld [vmem:[%s170 + $0x4] sm:$0x1]
        %v260 = vld [vmem:[%s170 + $0x5] sm:$0x1]
        %v261 = vld [vmem:[%s170 + $0x6] sm:$0x1]
        %v262 = vld [vmem:[%s170 + $0x7] sm:$0x1]
        %v263 = vmul.f32 %v255, %v247
        %v264 = vmul.f32 %v256, %v248
        %v265 = vmul.f32 %v257, %v249
        %v266 = vmul.f32 %v258, %v250
        %v267 = vmul.f32 %v259, %v251
        %v268 = vmul.f32 %v260, %v252
        %v269 = vmul.f32 %v261, %v253
        %v270 = vmul.f32 %v262, %v254
        %v279 = vcombine.low %v263, %v264
        %v280 = vcombine.low %v265, %v266
        %v281 = vcombine.low %v267, %v268
        %v282 = vcombine.low %v269, %v270
        %v284 = vunpack.c.l.s4 1966171168
        %v285 = vunpack.c.0.s8 %v284
        %v286 = vlaneseq
        %v287 = vshrl.u32 %v286, 7
        %v288 = vsub.s32 %v285, %v287
        %v289 = vrot.slane %v279, %v288
        %v291 = vunpack.c.l.s4 1966171168
        %v292 = vunpack.c.0.s8 %v291
        %v293 = vlaneseq
        %v294 = vshrl.u32 %v293, 7
        %v295 = vsub.s32 %v292, %v294
        %v296 = vrot.slane %v280, %v295
        %v298 = vunpack.c.l.s4 1966171168
        %v299 = vunpack.c.0.s8 %v298
        %v300 = vlaneseq
        %v301 = vshrl.u32 %v300, 7
        %v302 = vsub.s32 %v299, %v301
        %v303 = vrot.slane %v281, %v302
        %v305 = vunpack.c.l.s4 1966171168
        %v306 = vunpack.c.0.s8 %v305
        %v307 = vlaneseq
        %v308 = vshrl.u32 %v307, 7
        %v309 = vsub.s32 %v306, %v308
        %v310 = vrot.slane %v282, %v309
        %v311 = vcombine.low %v289, %v296
        %v312 = vcombine.low %v303, %v310
        %v314 = vunpack.c.l.s4 1966171168
        %v315 = vunpack.c.0.s8 %v314
        %v316 = vlaneseq
        %v317 = vshrl.u32 %v316, 7
        %v318 = vsub.s32 %v315, %v317
        %v319 = vrot.slane %v311, %v318
        %v321 = vunpack.c.l.s4 1966171168
        %v322 = vunpack.c.0.s8 %v321
        %v323 = vlaneseq
        %v324 = vshrl.u32 %v323, 7
        %v325 = vsub.s32 %v322, %v324
        %v326 = vrot.slane %v312, %v325
        %v327 = vcombine.low %v319, %v326
        %vm329 = vcmask 261120
        %330 = vst.msk [vmem:[%s204] sm:$0xff] %vm329, %v327
        %s331 = sand.u32 %s82, 1
        %s332 = scalar_lea.sflag [#allocation4], %s331
        %s333 = sand.u32 %s82, 1
        %s334 = smul.addr %s333, 8
        %s335 = scalar_lea.vmem [#allocation7], %s334
        // Predicated region
        $region37: #{tpu_custom_call.1} parent=27 // pred_check
          %p336 = pneg %p92
        $region38: #{tpu_custom_call.1} parent=27 // pred_check_branch
          %338 = sbr.rel (%p336) target = $region40
        $region39: #{tpu_custom_call.1} parent=27 // pred_region
          %s340 = ssub.s32 128, 128
          %341 = vsyncadd %s332, %s340
          %s342 = smul.addr %s22, 128
          %s343 = scalar_lea.hbm %s2, %s342
          %s345 = sshll.u32 %s335, 4
          %s346 = int_to_ptr.vmem [resolvable:$true] %s345
          %348 = dma.vmem_to_hbm [thread:$0]  %s346, 128, %s343, %s332
        $region40: #{tpu_custom_call.1} parent=27 // pred_fallthru
          _
      $region28: #{tpu_custom_call.1} parent=5 // pred_fallthru
        _
      %p349 = scmp.le.s32.totalorder 2, %s17
      // Predicated region
      $region41: #{tpu_custom_call.1} parent=5 // pred_check
        %p350 = pneg %p349
      $region42: #{tpu_custom_call.1} parent=5 // pred_check_branch
        %352 = sbr.rel (%p350) target = $region44
      $region43: #{tpu_custom_call.1} parent=5 // pred_region
        %s353 = ssub.s32 %s17, 2
        // Predicated region
        $region45: #{tpu_custom_call.1} parent=43 // pred_check
          %p354 = pneg %p98
        $region46: #{tpu_custom_call.1} parent=43 // pred_check_branch
          %356 = sbr.rel (%p354) target = $region48
        $region47: #{tpu_custom_call.1} parent=43 // pred_region
          %s357 = sand.u32 %s83, 1
          %s358 = scalar_lea.sflag [#allocation4], %s357
          %s359 = sand.u32 %s83, 1
          %s360 = smul.addr %s359, 8
          %s361 = scalar_lea.vmem [#allocation7], %s360
          %362 = dma.done %s358, 128
        $region48: #{tpu_custom_call.1} parent=43 // pred_fallthru
          _
      $region44: #{tpu_custom_call.1} parent=5 // pred_fallthru
        _
    $region6: #{tpu_custom_call.1} parent=1 // loop_footer
      %s21 = sadd.s32 1, %s17
    $region7: #{tpu_custom_call.1} parent=1 // loop_footer_branch
      %16 = sbr.rel target = $region3
    $region8: #{tpu_custom_call.1} parent=1 // loop_exit
      _
    %363 = vsyncpa [#allocation3], 1
    %s364 = scalar_lea.sflag [#allocation3], 1
    %365 = vsyncpa %s364, 1
    %366 = vsyncpa [#allocation6], 1
    %s367 = scalar_lea.sflag [#allocation6], 1
    %368 = vsyncpa %s367, 1
    %369 = vsyncpa [#allocation4], 1
    %s370 = scalar_lea.sflag [#allocation4], 1
    %371 = vsyncpa %s370, 1

</llo_original>
